<compile_context>
chip_gen: v6e
topology: v6e:2x2x1
jax: 0.10.0
libtpu: 0.0.40
codegen_flags: <defaults>
</compile_context>

<pallas_src>
import functools

import jax
import jax.numpy as jnp
from jax.experimental import pallas as pl
from jax.experimental.pallas import tpu as pltpu


def _cdiv(a: int, b: int) -> int:
    return (a + b - 1) // b


def _round_up(v: int, m: int) -> int:
    return _cdiv(v, m) * m


def _shift_regression_kernel(x_ref, o_ref, *, max_shift: int):
    # x_ref: (TB, D, TW) block in VMEM; o_ref: (TB, 1, TW).
    D = 2 * max_shift + 1
    xv = x_ref[...]
    # Compile-time weight constant (1, D, 1) in the input dtype (the shifts are
    # small integers, exactly representable); accumulate the channel reduction
    # in f32 and round once at the end.
    shift = jnp.arange(-max_shift, max_shift + 1).astype(xv.dtype).reshape(1, D, 1)
    acc = jnp.sum(xv * shift, axis=1, keepdims=True, dtype=jnp.float32)
    o_ref[...] = acc.astype(o_ref.dtype)


def _tpu_budgets():
    """Returns (target block bytes, double-buffered-input budget, scoped VMEM limit)."""
    try:
        vmem_cap = int(getattr(pltpu.get_tpu_info(), "vmem_capacity_bytes", 0)) or None
    except Exception:
        vmem_cap = None
    if vmem_cap is None or vmem_cap <= 64 * 1024 * 1024:
        # v7x-like (64 MiB VMEM, ~3.2 TB/s HBM) or unknown: large blocks, tight budget.
        return 4 * 1024 * 1024, 16 * 1024 * 1024, 40 * 1024 * 1024
    # v5e / v6e: 128 MiB physical VMEM.
    return 4 * 1024 * 1024, 32 * 1024 * 1024, 64 * 1024 * 1024


def shift_regression(x: jax.Array, max_shift: int) -> jax.Array:
    """x: [B, D, H, W] with D == 2*max_shift + 1 -> [B, 1, H, W]."""
    B, D, H, W = x.shape
    assert D == 2 * max_shift + 1, "channel dim must equal 2*max_shift+1"

    HW = H * W
    x_flat = x.reshape(B, D, HW)  # free reshape; no extra HBM pass

    target_bytes, io_budget, vmem_limit = _tpu_budgets()

    itemsize = jnp.dtype(x.dtype).itemsize
    sublane = max(8, 32 // itemsize)      # f32 -> 8, bf16 -> 16, int8 -> 32
    D_pad = _round_up(D, sublane)         # what the sublane tiling really stores
    row_bytes = D_pad * itemsize          # bytes per lane column of a (1, D, .) slab

    # ---- Lane tile: ~target_bytes of input per grid step, clamped so the two
    # double-buffered input blocks stay inside the VMEM budget. ---------------
    tw_from_target = max(128, (target_bytes // row_bytes) // 128 * 128)
    tw_from_budget = max(128, (io_budget // (2 * row_bytes)) // 128 * 128)
    max_tw = min(tw_from_target, tw_from_budget)
    TW = HW if HW <= max_tw else max_tw   # full lane extent is always legal
    tw_pad = _round_up(TW, 128)
    blk_bytes = D_pad * tw_pad * itemsize

    # ---- Batch tile: for small H*W a single (1, D, HW) slab is tiny; pack
    # several batch rows per step to amortize the ~600-cycle step overhead. ---
    TB = 1
    if HW <= max_tw and blk_bytes < target_bytes:
        TB = min(B, max(1, target_bytes // blk_bytes))
        TB = min(TB, max(1, io_budget // (2 * blk_bytes)))

    # ---- Megacore balance: prefer >= 8 grid steps (v7x has 2 TensorCores) as
    # long as each step still moves a reasonably large block (>= 512 KiB). ----
    MIN_STEPS = 8
    MIN_BLOCK_BYTES = 512 * 1024

    def n_steps(tb, tw):
        return _cdiv(B, tb) * _cdiv(HW, tw)

    while TB > 1 and n_steps(TB, TW) < MIN_STEPS:
        cand = _cdiv(TB, 2)
        if cand * blk_bytes < MIN_BLOCK_BYTES:
            break
        TB = cand
    while TW > 128 and n_steps(TB, TW) < MIN_STEPS:
        cand = max(128, ((TW // 2) // 128) * 128)
        if cand >= TW or TB * D_pad * _round_up(cand, 128) * itemsize < MIN_BLOCK_BYTES:
            break
        TW = cand

    grid = (_cdiv(B, TB), _cdiv(HW, TW))
    kernel = functools.partial(_shift_regression_kernel, max_shift=max_shift)

    # Note: ragged last blocks (B % TB or HW % TW != 0) read padded rows/lanes;
    # the garbage only reaches out-of-bounds output rows/lanes that Pallas
    # discards, and never mixes into valid lanes (the reduction is over D only).
    out_flat = pl.pallas_call(
        kernel,
        out_shape=jax.ShapeDtypeStruct((B, 1, HW), x.dtype),
        grid_spec=pltpu.PrefetchScalarGridSpec(
            num_scalar_prefetch=0,
            grid=grid,
            in_specs=[
                pl.BlockSpec((TB, D, TW), lambda b, t: (b, 0, t)),
            ],
            out_specs=pl.BlockSpec((TB, 1, TW), lambda b, t: (b, 0, t)),
        ),
        compiler_params=pltpu.CompilerParams(
            dimension_semantics=("parallel", "parallel"),
            vmem_limit_bytes=vmem_limit,
        ),
    )(x_flat)

    return out_flat.reshape(B, 1, H, W)


def shift_regression_ref(x: jax.Array, max_shift: int) -> jax.Array:
    D = x.shape[1]
    shift = jnp.arange(-max_shift, max_shift + 1, dtype=jnp.float32).reshape(1, D, 1, 1)
    return jnp.sum(x.astype(jnp.float32) * shift, axis=1, keepdims=True).astype(x.dtype)


if __name__ == "__main__":
    # Small shapes consistent with the module: D = 2*max_shift + 1
    max_shift = 4            # -> D = 9 channels
    B, H, W = 2, 16, 16
    D = 2 * max_shift + 1

    key = jax.random.PRNGKey(0)
    x = jax.random.normal(key, (B, D, H, W), dtype=jnp.float32)

    out = shift_regression(x, max_shift)
    out = jax.block_until_ready(out)

    ref = shift_regression_ref(x, max_shift)
    assert out.shape == (B, 1, H, W), out.shape
    assert jnp.allclose(out, ref, atol=1e-5, rtol=1e-5), "mismatch vs reference"

    print("KERNEL_OK")
</pallas_src>

<mosaic_0001>
module attributes {stable_mosaic.version = 11 : i64} {
  func.func @_shift_regression_kernel(%arg0: i32, %arg1: i32, %arg2: memref<2x9x256xf32, #tpu.memory_space<vmem>>, %arg3: memref<2x1x256xf32, #tpu.memory_space<vmem>>) attributes {dimension_semantics = [#tpu.dimension_semantics<parallel>, #tpu.dimension_semantics<parallel>], iteration_bounds = array<i64: 1, 1>, scalar_prefetch = 0 : i64, scratch_operands = 0 : i64, tpu.core_type = #tpu.core_type<tc>, window_params = [{transform_indices = @transform_0, window_bounds = array<i64: 2, 9, 256>}, {transform_indices = @transform_1, window_bounds = array<i64: 2, 1, 256>}]} {
    %c0 = arith.constant 0 : index
    %c0_0 = arith.constant 0 : index
    %c0_1 = arith.constant 0 : index
    %0 = vector.load %arg2[%c0, %c0_0, %c0_1] : memref<2x9x256xf32, #tpu.memory_space<vmem>>, vector<2x9x256xf32>
    %1 = tpu.iota {dimensions = array<i32: 1>} : vector<1x9xi32>
    %2 = vector.shape_cast %1 : vector<1x9xi32> to vector<9xi32>
    %c-4_i32 = arith.constant -4 : i32
    %3 = vector.broadcast %c-4_i32 : i32 to vector<9xi32>
    %4 = arith.addi %3, %2 : vector<9xi32>
    %5 = arith.sitofp %4 : vector<9xi32> to vector<9xf32>
    %6 = vector.shape_cast %5 : vector<9xf32> to vector<1x9x1xf32>
    %7 = vector.broadcast %6 : vector<1x9x1xf32> to vector<2x9x256xf32>
    %8 = arith.mulf %0, %7 : vector<2x9x256xf32>
    %cst = arith.constant dense<0.000000e+00> : vector<2x256xf32>
    %9 = vector.multi_reduction <add>, %8, %cst [1] : vector<2x9x256xf32> to vector<2x256xf32>
    %10 = vector.shape_cast %9 : vector<2x256xf32> to vector<2x1x256xf32>
    %c0_2 = arith.constant 0 : index
    %c0_3 = arith.constant 0 : index
    %c0_4 = arith.constant 0 : index
    %11 = vector.load %arg3[%c0_2, %c0_3, %c0_4] : memref<2x1x256xf32, #tpu.memory_space<vmem>>, vector<2x1x256xf32>
    tpu.vector_store %arg3[%c0_2, %c0_3, %c0_4], %10 {strides = array<i32>} : memref<2x1x256xf32, #tpu.memory_space<vmem>>, vector<2x1x256xf32>,
    return
  }
  func.func @transform_0(%arg0: i32, %arg1: i32) -> (i32, i32, i32) {
    %c0_i32 = arith.constant 0 : i32
    %c0_i32_0 = arith.constant 0 : i32
    return %arg0, %c0_i32, %arg1 : i32, i32, i32
  }
  func.func @transform_1(%arg0: i32, %arg1: i32) -> (i32, i32, i32) {
    %c0_i32 = arith.constant 0 : i32
    %c0_i32_0 = arith.constant 0 : i32
    return %arg0, %c0_i32, %arg1 : i32, i32, i32
  }
}

</mosaic_0001>

<llo_original>
// kernel: tpu_custom_call.1
$region0: #{tpu_custom_call.1}
  #allocation0 [shape = 'u32[]', space=smem, size = 0x4, offset = 0x4, fixed_abs, tag = 'smem constant byte address 0x4 - core index']
  #allocation1 [shape = 'u32[144,128]{1,0:T(1,128)}', space=vmem, size = 0x12000, scoped, tag = 'internal scratch']
  %s0 = inlined_call_operand.vmem [shape: f32[2,9,256], index: 0, kind: input, shape index: {}]
  %s1 = inlined_call_operand.hbm [shape: f32[2,1,256], index: 1, kind: output, shape index: {}]
  %s2 = sld [smem:[#allocation0]]
  $region14: #{tpu_custom_call.1} parent=0
    _
  %s4 = ssub.s32 1, %s2
  %s5 = scalar_select 0, %s4, %s2
  $region1: #{tpu_custom_call.1} parent=0
    #allocation2 [shape = 'u8[2048]{0}', space=vmem, size = 0x800, scoped, tag = 'output window, operand 0, single buffered']
    #allocation3 [shape = 's32[1]{0}', space=sflag, size = 0x4, scoped, tag = 'scoped memory for tpu_custom_call.1']
    %6 = vsyncpa [#allocation3], 0
    // Predicated region
    $region2: #{tpu_custom_call.1} parent=1 // pred_check
      _
    $region3: #{tpu_custom_call.1} parent=1 // pred_check_branch
      %8 = sbr.rel (0) target = $region5
    $region4: #{tpu_custom_call.1} parent=1 // pred_region
      _
    $region5: #{tpu_custom_call.1} parent=1 // pred_fallthru
      _
    %v9 = vld [vmem:[%s0] sm:$0xff]
    %v10 = vld [vmem:[%s0 + $0x8] sm:$0xff]
    %v11 = vld [vmem:[%s0 + $0x10] sm:$0x1]
    %v12 = vld [vmem:[%s0 + $0x18] sm:$0x1]
    %v13 = vld [vmem:[%s0 + $0x20] sm:$0xff]
    %v14 = vld [vmem:[%s0 + $0x28] sm:$0xff]
    %v15 = vld [vmem:[%s0 + $0x30] sm:$0x1]
    %v16 = vld [vmem:[%s0 + $0x38] sm:$0x1]
    %v17 = vlaneseq
    %v18 = vand.u32 %v17, 127
    %v19 = vadd.s32 %v18, 4294967292
    %v20 = vcvt.s32.f32 %v19
    %22 = vbcast.lane.b32.xlu0 %v20, 256
    %v23 = vpop.permute.xlu0 %22
    %s25 = sor.u32 256, 8
    %26 = vbcast.lane.b32.xlu0 %v20, %s25
    %v27 = vpop.permute.xlu0 %26
    %v28 = vmul.f32 %v9, %v23
    %v29 = vmul.f32 %v10, %v23
    %v30 = vmul.f32 %v11, %v27
    %v31 = vmul.f32 %v12, %v27
    %v32 = vmul.f32 %v13, %v23
    %v33 = vmul.f32 %v14, %v23
    %v34 = vmul.f32 %v15, %v27
    %v35 = vmul.f32 %v16, %v27
    %vm36 = vcmask 1040384
    %v37 = vsel %vm36, %v30, 0.0
    %v38 = vadd.f32 %v28, %v37
    %v39 = vrot.slane %v38, 4
    %v40 = vadd.f32 %v38, %v39
    %v41 = vrot.slane %v40, 2
    %v42 = vadd.f32 %v40, %v41
    %v43 = vrot.slane %v42, 1
    %v44 = vadd.f32 %v42, %v43
    %v45 = vsel %vm36, %v31, 0.0
    %v46 = vadd.f32 %v29, %v45
    %v47 = vrot.slane %v46, 4
    %v48 = vadd.f32 %v46, %v47
    %v49 = vrot.slane %v48, 2
    %v50 = vadd.f32 %v48, %v49
    %v51 = vrot.slane %v50, 1
    %v52 = vadd.f32 %v50, %v51
    %v53 = vsel %vm36, %v34, 0.0
    %v54 = vadd.f32 %v32, %v53
    %v55 = vrot.slane %v54, 4
    %v56 = vadd.f32 %v54, %v55
    %v57 = vrot.slane %v56, 2
    %v58 = vadd.f32 %v56, %v57
    %v59 = vrot.slane %v58, 1
    %v60 = vadd.f32 %v58, %v59
    %v61 = vsel %vm36, %v35, 0.0
    %v62 = vadd.f32 %v33, %v61
    %v63 = vrot.slane %v62, 4
    %v64 = vadd.f32 %v62, %v63
    %v65 = vrot.slane %v64, 2
    %v66 = vadd.f32 %v64, %v65
    %v67 = vrot.slane %v66, 1
    %v68 = vadd.f32 %v66, %v67
    %v73 = vcombine.low %v44, %v52
    %v75 = vunpack.c.l.s4 1966171168
    %v76 = vunpack.c.0.s8 %v75
    %v77 = vlaneseq
    %v78 = vshrl.u32 %v77, 7
    %v79 = vsub.s32 %v76, %v78
    %v80 = vrot.slane %v73, %v79
    %v82 = vunpack.c.l.s4 1966171168
    %v83 = vunpack.c.0.s8 %v82
    %v84 = vlaneseq
    %v85 = vshrl.u32 %v84, 7
    %v86 = vsub.s32 %v83, %v85
    %v87 = vrot.slane %v80, %v86
    %v88 = vcombine.low %v60, %v68
    %v90 = vunpack.c.l.s4 1966171168
    %v91 = vunpack.c.0.s8 %v90
    %v92 = vlaneseq
    %v93 = vshrl.u32 %v92, 7
    %v94 = vsub.s32 %v91, %v93
    %v95 = vrot.slane %v88, %v94
    %v97 = vunpack.c.l.s4 1966171168
    %v98 = vunpack.c.0.s8 %v97
    %v99 = vlaneseq
    %v100 = vshrl.u32 %v99, 7
    %v101 = vsub.s32 %v98, %v100
    %v102 = vrot.slane %v95, %v101
    %v105 = vlaneseq
    %vm106 = vcmp.ge.s32.totalorder %v105, 0
    %vm107 = vcmp.lt.s32.totalorder %v105, 256
    %vm108 = vmand %vm106, %vm107
    %109 = vst.msk [vmem:[#allocation2] sm:$0x3] %vm108, %v87
    %110 = vst.msk [vmem:[#allocation2 + $0x2] sm:$0x3] %vm108, %v102
    // Predicated region
    $region6: #{tpu_custom_call.1} parent=1 // pred_check
      _
    $region7: #{tpu_custom_call.1} parent=1 // pred_check_branch
      %112 = sbr.rel (0) target = $region9
    $region8: #{tpu_custom_call.1} parent=1 // pred_region
      %s114 = ssub.s32 64, 64
      %115 = vsyncadd [#allocation3], %s114
      %s116 = sshll.u32 [#allocation2], 4
      %s117 = int_to_ptr.vmem [resolvable:$true] %s116
      %122 = dma.vmem_to_hbm [thread:$0]  %s117, 64, %s1, [#allocation3], 32, 32, 2
    $region9: #{tpu_custom_call.1} parent=1 // pred_fallthru
      _
    // Predicated region
    $region10: #{tpu_custom_call.1} parent=1 // pred_check
      _
    $region11: #{tpu_custom_call.1} parent=1 // pred_check_branch
      %124 = sbr.rel (0) target = $region13
    $region12: #{tpu_custom_call.1} parent=1 // pred_region
      %125 = dma.done [#allocation3], 64
    $region13: #{tpu_custom_call.1} parent=1 // pred_fallthru
      _
    %126 = vsyncpa [#allocation3], 1

</llo_original>
